<compile_context>
chip_gen: v5e
topology: v5e:2x2
jax: 0.10.0
libtpu: 0.0.40
codegen_flags: <defaults>
</compile_context>

<pallas_src>
import math

import jax
import jax.numpy as jnp
from jax.experimental import pallas as pl
from jax.experimental.pallas import tpu as pltpu

EPS = 1e-5


def _make_layernorm_kernel(valid_dim, padded_dim):
    """Kernel closure over the (static) valid / padded lane widths."""
    need_mask = valid_dim != padded_dim
    inv_n = 1.0 / float(valid_dim)

    def layernorm_kernel(x_ref, scale_ref, shift_ref, o_ref):
        # x_ref: (tile_rows, padded_dim); scale_ref / shift_ref: (1, padded_dim)
        x = x_ref[...].astype(jnp.float32)
        if need_mask:
            lane = jax.lax.broadcasted_iota(jnp.int32, x.shape, dimension=x.ndim - 1)
            mask = lane < valid_dim
            x = jnp.where(mask, x, 0.0)
        # Population statistics over the valid lanes only (unbiased=False).
        mean = jnp.sum(x, axis=-1, keepdims=True) * inv_n
        xc = x - mean                                   # reused for var + norm
        if need_mask:
            xc = jnp.where(mask, xc, 0.0)
        var = jnp.sum(xc * xc, axis=-1, keepdims=True) * inv_n
        inv_std = jax.lax.rsqrt(var + EPS)              # EUP slot, effectively free
        out = scale_ref[...].astype(jnp.float32) * (xc * inv_std) \
            + shift_ref[...].astype(jnp.float32)
        o_ref[...] = out.astype(o_ref.dtype)

    return layernorm_kernel


def _row_multiple(dtype):
    # Sublane packing: 8 rows/vreg for 32-bit, 16 for 16-bit, 32 for 8-bit.
    itemsize = jnp.dtype(dtype).itemsize
    return {1: 32, 2: 16}.get(itemsize, 8)


def _vmem_capacity_bytes():
    try:
        info = pltpu.get_tpu_info()
        cap = getattr(info, "vmem_capacity_bytes", None)
        if cap:
            return int(cap)
    except Exception:
        pass
    return 64 * 1024 * 1024  # conservative (v7x-sized) fallback


def _default_tile_rows(rows, emb_padded, dtype, vmem_cap):
    rm = _row_multiple(dtype)
    itemsize = jnp.dtype(dtype).itemsize
    # Per-row VMEM footprint per grid step:
    #   in tile  (double-buffered): 2 * itemsize
    #   out tile (double-buffered): 2 * itemsize
    #   f32 intermediates live in the body (x upcast, xc, out): ~3 * 4 bytes
    bytes_per_row = emb_padded * (4 * itemsize + 12)
    budget = vmem_cap // 2                     # keep working set within ~half of VMEM
    tile = max(rm, budget // bytes_per_row)

    # Cap by bytes-per-tile instead of a fixed row count: ~4 MiB of *input* per
    # grid step sits at the flat part of the measured HBM-roofline curve.
    cap_rows = max(rm, (4 << 20) // max(1, emb_padded * itemsize))
    tile = min(tile, cap_rows)

    # Prefer >= 8 grid steps (>= 4 per v7x TensorCore) so DMA overlaps compute,
    # but never shrink tiles below ~1 MiB, where per-step overhead dominates.
    if rows > rm:
        floor_rows = max(rm, (1 << 20) // max(1, emb_padded * itemsize))
        tile = min(tile, max(pl.cdiv(rows, 8), floor_rows))

    # Don't exceed the (sublane-rounded) number of rows; round to packing multiple.
    rows_rounded = pl.cdiv(max(rows, 1), rm) * rm
    tile = min(tile, rows_rounded)
    tile = max(rm, (tile // rm) * rm)
    return int(tile)


def layer_norm(x, scale, shift, *, tile_rows=None):
    """x: [..., emb_dim]; scale, shift: [emb_dim]."""
    orig_shape = x.shape
    emb_dim = orig_shape[-1]
    rows = math.prod(orig_shape[:-1]) if len(orig_shape) > 1 else 1

    # Lane-pad emb_dim to a multiple of 128 so output stores are unmasked vst;
    # the reduction is masked to the valid lanes inside the kernel.
    emb_padded = pl.cdiv(emb_dim, 128) * 128
    pad = emb_padded - emb_dim

    x2 = x.reshape(rows, emb_dim)
    scale2 = scale.reshape(1, emb_dim)
    shift2 = shift.reshape(1, emb_dim)
    if pad:
        x2 = jnp.pad(x2, ((0, 0), (0, pad)))
        scale2 = jnp.pad(scale2, ((0, 0), (0, pad)))
        shift2 = jnp.pad(shift2, ((0, 0), (0, pad)))

    vmem_cap = _vmem_capacity_bytes()
    if tile_rows is None:
        tile_rows = _default_tile_rows(rows, emb_padded, x.dtype, vmem_cap)

    grid = (pl.cdiv(rows, tile_rows),)

    # VMEM limit: double-buffered in/out tiles + f32 intermediates + params, with
    # margin, clamped to 3/4 of physical VMEM (v7x has only 64 MiB per core).
    itemsize = jnp.dtype(x.dtype).itemsize
    tile_elems = tile_rows * emb_padded
    needed = (4 * tile_elems * itemsize      # in + out tiles, double-buffered
              + 3 * tile_elems * 4           # f32 x / xc / out intermediates
              + 8 * emb_padded * 4)          # scale/shift + slack
    vmem_limit = int(min(max(2 * needed, 16 << 20), (3 * vmem_cap) // 4))
    vmem_limit = max(vmem_limit, int(needed))

    kernel = _make_layernorm_kernel(emb_dim, emb_padded)

    # NOTE: the ragged last row-block (rows % tile_rows != 0) is masked by Pallas
    # on the output store; padded rows compute on stale VMEM, which is benign for
    # this purely row-wise op.
    out = pl.pallas_call(
        kernel,
        out_shape=jax.ShapeDtypeStruct((rows, emb_padded), x.dtype),
        grid_spec=pltpu.PrefetchScalarGridSpec(
            num_scalar_prefetch=0,
            grid=grid,
            in_specs=[
                pl.BlockSpec((tile_rows, emb_padded), lambda i: (i, 0)),
                pl.BlockSpec((1, emb_padded), lambda i: (0, 0)),
                pl.BlockSpec((1, emb_padded), lambda i: (0, 0)),
            ],
            out_specs=pl.BlockSpec((tile_rows, emb_padded), lambda i: (i, 0)),
        ),
        compiler_params=pltpu.CompilerParams(
            dimension_semantics=("parallel",),
            vmem_limit_bytes=vmem_limit,
        ),
    )(x2, scale2, shift2)

    if pad:
        out = out[:, :emb_dim]
    return out.reshape(orig_shape)


def _reference(x, scale, shift):
    mean = jnp.mean(x, axis=-1, keepdims=True)
    var = jnp.mean((x - mean) ** 2, axis=-1, keepdims=True)
    return scale * ((x - mean) / jnp.sqrt(var + EPS)) + shift


if __name__ == "__main__":
    # emb_dim=128 keeps the lane dimension dense (multiple of 128), matching how
    # real transformer emb_dims (768/1024/4096) use this kernel.
    batch, seq, emb_dim = 2, 8, 128

    key = jax.random.PRNGKey(0)
    kx, ks, kb, kx2 = jax.random.split(key, 4)
    x = jax.random.normal(kx, (batch, seq, emb_dim), dtype=jnp.float32)

    # Parameters matching nn.Parameter(torch.ones/zeros(emb_dim)).
    scale = jnp.ones((emb_dim,), dtype=jnp.float32)
    shift = jnp.zeros((emb_dim,), dtype=jnp.float32)

    out = jax.block_until_ready(layer_norm(x, scale, shift))
    assert jnp.allclose(out, _reference(x, scale, shift), atol=1e-5, rtol=1e-5), \
        "mismatch vs reference (default params)"

    # Non-trivial affine parameters (still deterministic).
    scale2 = 1.0 + 0.1 * jax.random.normal(ks, (emb_dim,), dtype=jnp.float32)
    shift2 = 0.1 * jax.random.normal(kb, (emb_dim,), dtype=jnp.float32)
    out2 = jax.block_until_ready(layer_norm(x, scale2, shift2))
    assert jnp.allclose(out2, _reference(x, scale2, shift2), atol=1e-5, rtol=1e-5), \
        "mismatch vs reference (random params)"

    # emb_dim not a multiple of 128 exercises the lane-padded / masked-reduction path.
    emb_odd = 100
    x_odd = jax.random.normal(kx2, (batch, seq, emb_odd), dtype=jnp.float32)
    scale_odd = jnp.ones((emb_odd,), dtype=jnp.float32)
    shift_odd = jnp.zeros((emb_odd,), dtype=jnp.float32)
    out3 = jax.block_until_ready(layer_norm(x_odd, scale_odd, shift_odd))
    assert jnp.allclose(out3, _reference(x_odd, scale_odd, shift_odd),
                        atol=1e-5, rtol=1e-5), \
        "mismatch vs reference (non-multiple-of-128 emb_dim)"

    print("KERNEL_OK")
</pallas_src>

<mosaic_0001>
module attributes {stable_mosaic.version = 11 : i64} {
  func.func @layernorm_kernel(%arg0: i32, %arg1: memref<16x128xf32, #tpu.memory_space<vmem>>, %arg2: memref<1x128xf32, #tpu.memory_space<vmem>>, %arg3: memref<1x128xf32, #tpu.memory_space<vmem>>, %arg4: memref<16x128xf32, #tpu.memory_space<vmem>>) attributes {dimension_semantics = [#tpu.dimension_semantics<parallel>], iteration_bounds = array<i64: 1>, scalar_prefetch = 0 : i64, scratch_operands = 0 : i64, tpu.core_type = #tpu.core_type<tc>, window_params = [{transform_indices = @transform_0, window_bounds = array<i64: 16, 128>}, {pipeline_mode = #tpu.pipeline_mode<synchronous>, transform_indices = @transform_1, window_bounds = array<i64: 1, 128>}, {pipeline_mode = #tpu.pipeline_mode<synchronous>, transform_indices = @transform_2, window_bounds = array<i64: 1, 128>}, {transform_indices = @transform_3, window_bounds = array<i64: 16, 128>}]} {
    %c0 = arith.constant 0 : index
    %c0_0 = arith.constant 0 : index
    %0 = vector.load %arg1[%c0, %c0_0] : memref<16x128xf32, #tpu.memory_space<vmem>>, vector<16x128xf32>
    %cst = arith.constant dense<0.000000e+00> : vector<16xf32>
    %1 = vector.multi_reduction <add>, %0, %cst [1] : vector<16x128xf32> to vector<16xf32>
    %2 = vector.shape_cast %1 : vector<16xf32> to vector<16x1xf32>
    %cst_1 = arith.constant 7.812500e-03 : f32
    %3 = vector.broadcast %cst_1 : f32 to vector<16x1xf32>
    %4 = arith.mulf %2, %3 : vector<16x1xf32>
    %5 = vector.broadcast %4 : vector<16x1xf32> to vector<16x128xf32>
    %6 = arith.subf %0, %5 : vector<16x128xf32>
    %7 = arith.mulf %6, %6 : vector<16x128xf32>
    %cst_2 = arith.constant dense<0.000000e+00> : vector<16xf32>
    %8 = vector.multi_reduction <add>, %7, %cst_2 [1] : vector<16x128xf32> to vector<16xf32>
    %9 = vector.shape_cast %8 : vector<16xf32> to vector<16x1xf32>
    %cst_3 = arith.constant 7.812500e-03 : f32
    %10 = vector.broadcast %cst_3 : f32 to vector<16x1xf32>
    %11 = arith.mulf %9, %10 : vector<16x1xf32>
    %cst_4 = arith.constant 9.99999974E-6 : f32
    %12 = vector.broadcast %cst_4 : f32 to vector<16x1xf32>
    %13 = arith.addf %11, %12 : vector<16x1xf32>
    %14 = math.rsqrt %13 : vector<16x1xf32>
    %c0_5 = arith.constant 0 : index
    %c0_6 = arith.constant 0 : index
    %15 = vector.load %arg2[%c0_5, %c0_6] : memref<1x128xf32, #tpu.memory_space<vmem>>, vector<1x128xf32>
    %16 = vector.broadcast %14 : vector<16x1xf32> to vector<16x128xf32>
    %17 = arith.mulf %6, %16 : vector<16x128xf32>
    %18 = vector.broadcast %15 : vector<1x128xf32> to vector<16x128xf32>
    %19 = arith.mulf %18, %17 : vector<16x128xf32>
    %c0_7 = arith.constant 0 : index
    %c0_8 = arith.constant 0 : index
    %20 = vector.load %arg3[%c0_7, %c0_8] : memref<1x128xf32, #tpu.memory_space<vmem>>, vector<1x128xf32>
    %21 = vector.broadcast %20 : vector<1x128xf32> to vector<16x128xf32>
    %22 = arith.addf %19, %21 : vector<16x128xf32>
    %c0_9 = arith.constant 0 : index
    %c0_10 = arith.constant 0 : index
    %23 = vector.load %arg4[%c0_9, %c0_10] : memref<16x128xf32, #tpu.memory_space<vmem>>, vector<16x128xf32>
    tpu.vector_store %arg4[%c0_9, %c0_10], %22 {strides = array<i32>} : memref<16x128xf32, #tpu.memory_space<vmem>>, vector<16x128xf32>,
    return
  }
  func.func @transform_0(%arg0: i32) -> (i32, i32) {
    %c0_i32 = arith.constant 0 : i32
    %c0_i32_0 = arith.constant 0 : i32
    return %arg0, %c0_i32 : i32, i32
  }
  func.func @transform_1(%arg0: i32) -> (i32, i32) {
    %c0_i32 = arith.constant 0 : i32
    %c0_i32_0 = arith.constant 0 : i32
    %c0_i32_1 = arith.constant 0 : i32
    return %c0_i32, %c0_i32_0 : i32, i32
  }
  func.func @transform_2(%arg0: i32) -> (i32, i32) {
    %c0_i32 = arith.constant 0 : i32
    %c0_i32_0 = arith.constant 0 : i32
    %c0_i32_1 = arith.constant 0 : i32
    return %c0_i32, %c0_i32_0 : i32, i32
  }
  func.func @transform_3(%arg0: i32) -> (i32, i32) {
    %c0_i32 = arith.constant 0 : i32
    %c0_i32_0 = arith.constant 0 : i32
    return %arg0, %c0_i32 : i32, i32
  }
}

</mosaic_0001>

<llo_original>
// kernel: tpu_custom_call.1
$region0: #{tpu_custom_call.1}
  #allocation0 [shape = 'u32[]', space=smem, size = 0x4, offset = 0x4, fixed_abs, tag = 'smem constant byte address 0x4 - core index']
  #allocation1 [shape = 'u32[72,128]{1,0:T(1,128)}', space=vmem, size = 0x9000, scoped, tag = 'internal scratch']
  %s0 = inlined_call_operand.hbm [shape: f32[16,128], index: 0, kind: input, shape index: {}]
  %s1 = inlined_call_operand.hbm [shape: f32[1,128], index: 1, kind: input, shape index: {}]
  %s2 = inlined_call_operand.vmem [shape: f32[1,128], index: 2, kind: input, shape index: {}]
  %s3 = inlined_call_operand.hbm [shape: f32[16,128], index: 3, kind: output, shape index: {}]
  %s4 = sld [smem:[#allocation0]]
  $region30: #{tpu_custom_call.1} parent=0
    _
  %s6 = ssub.s32 1, %s4
  %s7 = scalar_select 0, %s6, %s4
  $region1: #{tpu_custom_call.1} parent=0
    #allocation2 [shape = 'u8[8192]{0}', space=vmem, size = 0x2000, scoped, tag = 'input window, operand 0, single buffered']
    #allocation3 [shape = 's32[1]{0}', space=sflag, size = 0x4, scoped, tag = 'scoped memory for tpu_custom_call.1']
    #allocation4 [shape = 's32[1]{0}', space=sflag, size = 0x4, scoped, tag = 'scoped memory for tpu_custom_call.1']
    #allocation5 [shape = 'u8[512]{0}', space=vmem, size = 0x400, scoped, tag = 'input window, operand 1, single buffered']
    #allocation6 [shape = 's32[1]{0}', space=sflag, size = 0x4, scoped, tag = 'scoped memory for tpu_custom_call.1']
    #allocation7 [shape = 'u8[8192]{0}', space=vmem, size = 0x2000, scoped, tag = 'output window, operand 0, single buffered']
    %8 = vsyncpa [#allocation3], 0
    %9 = vsyncpa [#allocation6], 0
    %10 = vsyncpa [#allocation4], 0
    // Predicated region
    $region2: #{tpu_custom_call.1} parent=1 // pred_check
      _
    $region3: #{tpu_custom_call.1} parent=1 // pred_check_branch
      %12 = sbr.rel (0) target = $region5
    $region4: #{tpu_custom_call.1} parent=1 // pred_region
      %14 = vsyncadd [#allocation3], 0
      %s15 = sshll.u32 %s0, 4
      %s16 = int_to_ptr.hbm [resolvable:$true] %s15
      %s17 = sshll.u32 [#allocation2], 4
      %s18 = int_to_ptr.vmem [resolvable:$true] %s17
      %23 = dma.hbm_to_vmem [thread:$0]  %s16, 256, %s18, [#allocation3], 128, 128, 8
    $region5: #{tpu_custom_call.1} parent=1 // pred_fallthru
      _
    // Predicated region
    $region6: #{tpu_custom_call.1} parent=1 // pred_check
      _
    $region7: #{tpu_custom_call.1} parent=1 // pred_check_branch
      %25 = sbr.rel (0) target = $region9
    $region8: #{tpu_custom_call.1} parent=1 // pred_region
      %27 = vsyncadd [#allocation6], 0
      %s29 = sshll.u32 %s1, 4
      %s30 = int_to_ptr.hbm [resolvable:$true] %s29
      %s31 = sshll.u32 [#allocation5], 4
      %s32 = int_to_ptr.vmem [resolvable:$true] %s31
      %34 = dma.hbm_to_vmem [thread:$0]  %s30, 16, %s32, [#allocation6]
    $region9: #{tpu_custom_call.1} parent=1 // pred_fallthru
      _
    // Predicated region
    $region10: #{tpu_custom_call.1} parent=1 // pred_check
      _
    $region11: #{tpu_custom_call.1} parent=1 // pred_check_branch
      %36 = sbr.rel (0) target = $region13
    $region12: #{tpu_custom_call.1} parent=1 // pred_region
      _
    $region13: #{tpu_custom_call.1} parent=1 // pred_fallthru
      _
    // Predicated region
    $region14: #{tpu_custom_call.1} parent=1 // pred_check
      _
    $region15: #{tpu_custom_call.1} parent=1 // pred_check_branch
      %38 = sbr.rel (0) target = $region17
    $region16: #{tpu_custom_call.1} parent=1 // pred_region
      %40 = dma.done [#allocation3], 256
    $region17: #{tpu_custom_call.1} parent=1 // pred_fallthru
      _
    // Predicated region
    $region18: #{tpu_custom_call.1} parent=1 // pred_check
      _
    $region19: #{tpu_custom_call.1} parent=1 // pred_check_branch
      %42 = sbr.rel (0) target = $region21
    $region20: #{tpu_custom_call.1} parent=1 // pred_region
      %44 = dma.done [#allocation6], 16
    $region21: #{tpu_custom_call.1} parent=1 // pred_fallthru
      _
    %v45 = vld [vmem:[#allocation2] sm:$0xff]
    %v46 = vld [vmem:[#allocation2 + $0x8] sm:$0xff]
    %47 = vadd.xlane.f32.xlu0 %v45
    %v48 = vpop.xlane.xlu0 %47
    %49 = vadd.xlane.f32.xlu0 %v46
    %v50 = vpop.xlane.xlu0 %49
    %v51 = vmul.f32 %v48, 0.0078125
    %v52 = vmul.f32 %v50, 0.0078125
    %v53 = vsub.f32 %v45, %v51
    %v54 = vsub.f32 %v46, %v52
    %v55 = vmul.f32 %v53, %v53
    %v56 = vmul.f32 %v54, %v54
    %57 = vadd.xlane.f32.xlu0 %v55
    %v58 = vpop.xlane.xlu0 %57
    %59 = vadd.xlane.f32.xlu0 %v56
    %v60 = vpop.xlane.xlu0 %59
    %v61 = vmul.f32 %v58, 0.0078125
    %v62 = vmul.f32 %v60, 0.0078125
    %v63 = vadd.f32 %v61, 1e-05
    %v64 = vadd.f32 %v62, 1e-05
    %v65 = vrsqrt.pop %v63
    %v66 = vmul.f32 %v65, %v63
    %v67 = vmul.f32 %v66, %v65
    %v68 = vmul.f32 0.5, %v67
    %v69 = vsub.f32 1.5, %v68
    %v70 = vmul.f32 %v65, %v69
    %vm71 = vweird.f32 %v63
    %vm72 = vweird.f32 %v65
    %vm73 = vmor %vm71, %vm72
    %v74 = vsel %vm73, %v65, %v70
    %v75 = vrsqrt.pop %v64
    %v76 = vmul.f32 %v75, %v64
    %v77 = vmul.f32 %v76, %v75
    %v78 = vmul.f32 0.5, %v77
    %v79 = vsub.f32 1.5, %v78
    %v80 = vmul.f32 %v75, %v79
    %vm81 = vweird.f32 %v64
    %vm82 = vweird.f32 %v75
    %vm83 = vmor %vm81, %vm82
    %v84 = vsel %vm83, %v75, %v80
    %v85 = vld [vmem:[#allocation5] sm:$0x1]
    %v86 = vmul.f32 %v53, %v74
    %v87 = vmul.f32 %v54, %v84
    %v89 = vperm.slane %v85, 0
    %v91 = vmul.f32 %v89, %v86
    %v92 = vmul.f32 %v89, %v87
    %v93 = vld [vmem:[%s2] sm:$0x1]
    %v95 = vperm.slane %v93, 0
    %v97 = vadd.f32 %v91, %v95
    %v98 = vadd.f32 %v92, %v95
    %99 = vst [vmem:[#allocation7] sm:$0xff] %v97
    %100 = vst [vmem:[#allocation7 + $0x8] sm:$0xff] %v98
    // Predicated region
    $region22: #{tpu_custom_call.1} parent=1 // pred_check
      _
    $region23: #{tpu_custom_call.1} parent=1 // pred_check_branch
      %102 = sbr.rel (0) target = $region25
    $region24: #{tpu_custom_call.1} parent=1 // pred_region
      %104 = vsyncadd [#allocation4], 0
      %s105 = sshll.u32 [#allocation7], 4
      %s106 = int_to_ptr.vmem [resolvable:$true] %s105
      %s107 = sshll.u32 %s3, 4
      %s108 = int_to_ptr.hbm [resolvable:$true] %s107
      %113 = dma.vmem_to_hbm [thread:$0]  %s106, 256, %s108, [#allocation4], 128, 128, 8
    $region25: #{tpu_custom_call.1} parent=1 // pred_fallthru
      _
    // Predicated region
    $region26: #{tpu_custom_call.1} parent=1 // pred_check
      _
    $region27: #{tpu_custom_call.1} parent=1 // pred_check_branch
      %115 = sbr.rel (0) target = $region29
    $region28: #{tpu_custom_call.1} parent=1 // pred_region
      %117 = dma.done [#allocation4], 256
    $region29: #{tpu_custom_call.1} parent=1 // pred_fallthru
      _
    %118 = vsyncpa [#allocation3], 1
    %119 = vsyncpa [#allocation6], 1
    %120 = vsyncpa [#allocation4], 1

</llo_original>
